<compile_context>
chip_gen: v7x
topology: tpu7x:2x2x1
jax: 0.10.0
libtpu: 0.0.40
codegen_flags: <defaults>
</compile_context>

<pallas_src>
import math

import jax
import jax.numpy as jnp
from jax.experimental import pallas as pl
from jax.experimental.pallas import tpu as pltpu


_SUBLANES = 8
_LANES = 128
_TILE = _SUBLANES * _LANES  # 1024 f32 elements = one (8, 128) vreg tile


def _weights_copy_kernel(p_ref, out_ref):
    # forward(observation) ignores the observation; output is the stored
    # parameter verbatim.  Whole-tile, lane-dense, unmasked copy.
    out_ref[...] = p_ref[...]


def _pad_to_lane_dense(p_flat):
    """Pad a flat f32 vector to a lane-dense (8, k*128) slab."""
    n = p_flat.shape[0]
    padded = max(_TILE, math.ceil(n / _TILE) * _TILE)
    p_padded = jnp.zeros((padded,), dtype=p_flat.dtype).at[:n].set(p_flat)
    return p_padded.reshape(_SUBLANES, padded // _SUBLANES)


def model_weight_container_forward(observation, p):
    """Pallas equivalent of ModelWeightContainerTorch.forward(observation).

    Returns the weights dict {'p': p} (mirrors state_dict()).  The observation
    argument is accepted to mirror the PyTorch signature but is never touched
    by the kernel (it is ignored by the original forward as well).
    """
    del observation  # forward() ignores it; do not DMA it.

    p_flat = p.astype(jnp.float32).reshape(-1)
    n = p_flat.shape[0]
    p2d = _pad_to_lane_dense(p_flat)  # lane-dense (8, k*128) slab

    out2d = pl.pallas_call(
        _weights_copy_kernel,
        out_shape=jax.ShapeDtypeStruct(p2d.shape, p2d.dtype),
        in_specs=[pl.BlockSpec(memory_space=pltpu.MemorySpace.VMEM)],
        out_specs=pl.BlockSpec(memory_space=pltpu.MemorySpace.VMEM),
        input_output_aliases={0: 0},  # output HBM buffer aliases padded input
    )(p2d)

    # forward() returns self.weights == state_dict() == OrderedDict({'p': p})
    return {"p": out2d.reshape(-1)[:n].reshape(p.shape)}


if __name__ == "__main__":
    key = jax.random.PRNGKey(0)
    k_act, k_obs = jax.random.split(key)

    # Deterministic "action_init" parameter (small action vector, 4-dim).
    action_init = jax.random.normal(k_act, (4,), dtype=jnp.float32)
    # Observation (ignored by the forward pass, as in the PyTorch module).
    observation = jax.random.normal(k_obs, (8,), dtype=jnp.float32)

    weights = model_weight_container_forward(observation, action_init)
    jax.block_until_ready(weights["p"])

    assert weights["p"].shape == action_init.shape
    assert weights["p"].dtype == jnp.float32
    assert jnp.allclose(weights["p"], action_init)

    print("KERNEL_OK")
</pallas_src>

<mosaic_0001>
module attributes {stable_mosaic.version = 11 : i64} {
  func.func @_weights_copy_kernel(%arg0: memref<8x128xf32, #tpu.memory_space<vmem>>, %arg1: memref<8x128xf32, #tpu.memory_space<vmem>>) attributes {dimension_semantics = [], scalar_prefetch = 0 : i64, scratch_operands = 0 : i64, tpu.core_type = #tpu.core_type<tc>} {
    %c0 = arith.constant 0 : index
    %c0_0 = arith.constant 0 : index
    %0 = vector.load %arg0[%c0, %c0_0] : memref<8x128xf32, #tpu.memory_space<vmem>>, vector<8x128xf32>
    %c0_1 = arith.constant 0 : index
    %c0_2 = arith.constant 0 : index
    %1 = vector.load %arg1[%c0_1, %c0_2] : memref<8x128xf32, #tpu.memory_space<vmem>>, vector<8x128xf32>
    tpu.vector_store %arg1[%c0_1, %c0_2], %0 {strides = array<i32>} : memref<8x128xf32, #tpu.memory_space<vmem>>, vector<8x128xf32>,
    return
  }
}

</mosaic_0001>

<llo_original>
// kernel: tpu_custom_call.1
$region0: #{tpu_custom_call.1}
  #allocation0 [shape = 'u32[]', space=smem, size = 0x4, offset = 0x4, fixed_abs, tag = 'smem constant byte address 0x4 - core index']
  #allocation1 [shape = 'u32[144,128]{1,0:T(1,128)}', space=vmem, size = 0x12000, scoped, tag = 'internal scratch']
  %s0 = inlined_call_operand.hbm [shape: f32[8,128], index: 0, kind: input, shape index: {}, may-alias: {0,1}]
  %s1 = inlined_call_operand.hbm [shape: f32[8,128], index: 1, kind: output, shape index: {}, may-alias: {0,1}]
  %s2 = sld [smem:[#allocation0]]
  $region18: #{tpu_custom_call.1} parent=0
    _
  %s4 = ssub.s32 1, %s2
  %s5 = scalar_select 0, %s4, %s2
  $region1: #{tpu_custom_call.1} parent=0
    #allocation2 [shape = 'u8[4096]{0}', space=vmem, size = 0x1000, scoped, tag = 'input window, operand 0, single buffered']
    #allocation3 [shape = 's32[1]{0}', space=sflag, size = 0x4, scoped, tag = 'scoped memory for tpu_custom_call.1']
    #allocation4 [shape = 's32[1]{0}', space=sflag, size = 0x4, scoped, tag = 'scoped memory for tpu_custom_call.1']
    #allocation5 [shape = 'u8[4096]{0}', space=vmem, size = 0x1000, scoped, tag = 'output window, operand 0, single buffered']
    %6 = vsyncpa [#allocation3], 0
    %7 = vsyncpa [#allocation4], 0
    // Predicated region
    $region2: #{tpu_custom_call.1} parent=1 // pred_check
      _
    $region3: #{tpu_custom_call.1} parent=1 // pred_check_branch
      %9 = sbr.rel (0) target = $region5
    $region4: #{tpu_custom_call.1} parent=1 // pred_region
      %s11 = ssub.s32 128, 128
      %12 = vsyncadd [#allocation3], %s11
      %s14 = sshll.u32 [#allocation2], 4
      %s15 = int_to_ptr.vmem [resolvable:$true] %s14
      %17 = dma.hbm_to_vmem [thread:$0]  %s0, 128, %s15, [#allocation3]
    $region5: #{tpu_custom_call.1} parent=1 // pred_fallthru
      _
    // Predicated region
    $region6: #{tpu_custom_call.1} parent=1 // pred_check
      _
    $region7: #{tpu_custom_call.1} parent=1 // pred_check_branch
      %19 = sbr.rel (0) target = $region9
    $region8: #{tpu_custom_call.1} parent=1 // pred_region
      %20 = dma.done [#allocation3], 128
    $region9: #{tpu_custom_call.1} parent=1 // pred_fallthru
      _
    %v21 = vld [vmem:[#allocation2] sm:$0xff]
    %22 = vst [vmem:[#allocation5] sm:$0xff] %v21
    // Predicated region
    $region10: #{tpu_custom_call.1} parent=1 // pred_check
      _
    $region11: #{tpu_custom_call.1} parent=1 // pred_check_branch
      %24 = sbr.rel (0) target = $region13
    $region12: #{tpu_custom_call.1} parent=1 // pred_region
      %s26 = ssub.s32 128, 128
      %27 = vsyncadd [#allocation4], %s26
      %s29 = sshll.u32 [#allocation5], 4
      %s30 = int_to_ptr.vmem [resolvable:$true] %s29
      %32 = dma.vmem_to_hbm [thread:$0]  %s30, 128, %s1, [#allocation4]
    $region13: #{tpu_custom_call.1} parent=1 // pred_fallthru
      _
    // Predicated region
    $region14: #{tpu_custom_call.1} parent=1 // pred_check
      _
    $region15: #{tpu_custom_call.1} parent=1 // pred_check_branch
      %34 = sbr.rel (0) target = $region17
    $region16: #{tpu_custom_call.1} parent=1 // pred_region
      %35 = dma.done [#allocation4], 128
    $region17: #{tpu_custom_call.1} parent=1 // pred_fallthru
      _
    %36 = vsyncpa [#allocation3], 1
    %37 = vsyncpa [#allocation4], 1

</llo_original>
